<compile_context>
chip_gen: v6e
topology: v6e:2x2x1
jax: 0.10.0
libtpu: 0.0.40
codegen_flags: <defaults>
</compile_context>

<pallas_src>
import functools

import jax
import jax.numpy as jnp
from jax.experimental import pallas as pl
from jax.experimental.pallas import tpu as pltpu


def _round_up(n, m):
    return ((n + m - 1) // m) * m


def actor_kernel(x_ref, w_ref, b_ref, out_ref, *, state_dim, r1, hidden):
    # shared_net: Linear -> Tanh -> Linear -> Tanh ; mean_net: Linear
    x = x_ref[...].astype(jnp.bfloat16)                      # (tm, state_dim)
    if r1 != state_dim:
        # Zero-extend to the sublane-aligned slab row count in vregs (free VPU filler).
        x = jnp.concatenate(
            [x, jnp.zeros((x.shape[0], r1 - state_dim), x.dtype)], axis=1)

    w1 = w_ref[0:r1, :]                                      # (r1, hidden)       bf16
    w2 = w_ref[r1:r1 + hidden, :]                            # (hidden, hidden)   bf16
    w3 = w_ref[r1 + hidden:r1 + 2 * hidden, :]               # (hidden, hidden)   bf16, cols >= action_dim zero

    # bf16 operands on the MXU, f32 accumulation / bias / tanh on VPU+EUP.
    h1 = jnp.tanh(jnp.dot(x, w1, preferred_element_type=jnp.float32) + b_ref[0, :])
    h2 = jnp.tanh(jnp.dot(h1.astype(jnp.bfloat16), w2,
                          preferred_element_type=jnp.float32) + b_ref[1, :])
    m = jnp.dot(h2.astype(jnp.bfloat16), w3,
                preferred_element_type=jnp.float32) + b_ref[2, :]
    out_ref[...] = m                                         # lane-dense (tm, hidden) store


def pack_actor_params(params):
    """Pack weights/biases into two VMEM-friendly slabs; hoist exp(log_std)."""
    w1, b1, w2, b2, w3, b3, log_std = params
    state_dim, hidden = w1.shape
    action_dim = w3.shape[1]
    r1 = _round_up(state_dim, 8)  # sublane-aligned slice boundary inside the kernel

    w1p = jnp.zeros((r1, hidden), jnp.float32).at[:state_dim, :].set(w1)
    w3p = jnp.zeros((hidden, hidden), jnp.float32).at[:, :action_dim].set(w3)
    w_packed = jnp.concatenate([w1p, w2, w3p], axis=0).astype(jnp.bfloat16)  # (r1+2H, H)

    b_packed = jnp.zeros((3, hidden), jnp.float32)
    b_packed = b_packed.at[0, :].set(b1).at[1, :].set(b2).at[2, :action_dim].set(b3)

    std = jnp.exp(log_std)  # batch-independent: computed once here, not per forward call
    dims = (int(state_dim), int(hidden), int(action_dim), int(r1))
    return w_packed, b_packed, std, dims


def _choose_tm(B):
    """Batch tile: single block for the tiny act() path, >=2 balanced steps otherwise
    (keeps both v7x TensorCores busy), capped at 4096 rows to bound VMEM."""
    if B < 512:
        return B
    tm = _round_up(-(-B // 2), 8)
    return min(tm, 4096)


@functools.partial(jax.jit, static_argnames=("dims",))
def _actor_mean_packed(x, w_packed, b_packed, *, dims):
    state_dim, hidden, action_dim, r1 = dims
    B = x.shape[0]
    tm = _choose_tm(B)
    grid = (pl.cdiv(B, tm),)

    kernel = functools.partial(actor_kernel, state_dim=state_dim, r1=r1, hidden=hidden)
    w_rows = r1 + 2 * hidden

    mean_full = pl.pallas_call(
        kernel,
        out_shape=jax.ShapeDtypeStruct((B, hidden), jnp.float32),
        grid_spec=pltpu.PrefetchScalarGridSpec(
            num_scalar_prefetch=0,
            grid=grid,
            in_specs=[
                pl.BlockSpec((tm, state_dim), lambda i: (i, 0)),          # x: streamed over batch
                pl.BlockSpec((w_rows, hidden), lambda i: (0, 0)),         # packed bf16 weights: resident
                pl.BlockSpec((3, hidden), lambda i: (0, 0)),              # packed f32 biases: resident
            ],
            out_specs=pl.BlockSpec((tm, hidden), lambda i: (i, 0)),       # lane-dense output slab
        ),
        compiler_params=pltpu.CompilerParams(
            dimension_semantics=("parallel",),      # shards batch steps across TCs on v7x
            vmem_limit_bytes=32 * 1024 * 1024,      # covers tm=4096 on v5e's 16 MiB scoped default
        ),
    )(x, w_packed, b_packed)
    # Slice to action_dim outside the kernel (fused into the jitted wrapper).
    return mean_full[:, :action_dim]


def make_actor_forward(params):
    """Pack parameters ONCE and return a forward closure (recommended call path)."""
    w_packed, b_packed, std, dims = pack_actor_params(params)

    def forward(x):
        mean = _actor_mean_packed(x, w_packed, b_packed, dims=dims)
        return mean, std

    return forward


def actor_forward(x, params):
    """One-off convenience wrapper (re-packs params; prefer make_actor_forward)."""
    return make_actor_forward(params)(x)


def init_actor_params(key, state_dim, action_dim, hidden_size=64):
    """Deterministic init mimicking nn.Linear default (uniform +-1/sqrt(fan_in))."""
    ks = jax.random.split(key, 6)

    def linear(kw, kb, fan_in, fan_out):
        bound = 1.0 / jnp.sqrt(jnp.float32(fan_in))
        w = jax.random.uniform(kw, (fan_in, fan_out), jnp.float32, -bound, bound)
        b = jax.random.uniform(kb, (fan_out,), jnp.float32, -bound, bound)
        return w, b

    w1, b1 = linear(ks[0], ks[1], state_dim, hidden_size)
    w2, b2 = linear(ks[2], ks[3], hidden_size, hidden_size)
    w3, b3 = linear(ks[4], ks[5], hidden_size, action_dim)
    log_std = jnp.zeros((action_dim,), jnp.float32)  # nn.Parameter(torch.zeros(action_dim))
    return (w1, b1, w2, b2, w3, b3, log_std)


def actor_forward_ref(x, params):
    """Pure-JAX f32 reference for correctness check."""
    w1, b1, w2, b2, w3, b3, log_std = params
    h = jnp.tanh(x @ w1 + b1)
    h = jnp.tanh(h @ w2 + b2)
    return h @ w3 + b3, jnp.exp(log_std)


# TODO(synk): get_distribution / act (Normal sampling, log_prob) are host-side RL utilities
# outside forward(); not implemented as kernels.

if __name__ == "__main__":
    state_dim, action_dim, hidden_size = 8, 4, 64
    batch = 2

    key = jax.random.PRNGKey(0)
    k_params, k_x, k_x_big = jax.random.split(key, 3)
    params = init_actor_params(k_params, state_dim, action_dim, hidden_size)

    forward = make_actor_forward(params)   # packs params once

    # Small batch (matches Actor.act usage): single-block, latency-bound path.
    x = jax.random.normal(k_x, (batch, state_dim), jnp.float32)
    mean, std = forward(x)
    mean = jax.block_until_ready(mean)
    std = jax.block_until_ready(std)

    mean_ref, std_ref = actor_forward_ref(x, params)
    assert mean.shape == (batch, action_dim)
    assert std.shape == (action_dim,)
    # bf16 MXU operands -> looser tolerance vs. the f32 reference (accumulation stays f32).
    assert jnp.allclose(mean, mean_ref, atol=3e-2, rtol=3e-2)
    assert jnp.allclose(std, std_ref, atol=1e-6, rtol=1e-6)

    # Larger batch: exercises the multi-step batch grid (2 steps of 512 rows) with
    # resident weights and both TensorCores on v7x.
    x_big = jax.random.normal(k_x_big, (1024, state_dim), jnp.float32)
    mean_big, _ = forward(x_big)
    mean_big = jax.block_until_ready(mean_big)
    mean_big_ref, _ = actor_forward_ref(x_big, params)
    assert mean_big.shape == (1024, action_dim)
    assert jnp.allclose(mean_big, mean_big_ref, atol=3e-2, rtol=3e-2)

    print("KERNEL_OK")
</pallas_src>

<mosaic_0001>
module attributes {stable_mosaic.version = 11 : i64} {
  func.func @actor_kernel(%arg0: i32, %arg1: memref<2x8xf32, #tpu.memory_space<vmem>>, %arg2: memref<136x64xbf16, #tpu.memory_space<vmem>>, %arg3: memref<3x64xf32, #tpu.memory_space<vmem>>, %arg4: memref<2x64xf32, #tpu.memory_space<vmem>>) attributes {dimension_semantics = [#tpu.dimension_semantics<parallel>], iteration_bounds = array<i64: 1>, scalar_prefetch = 0 : i64, scratch_operands = 0 : i64, tpu.core_type = #tpu.core_type<tc>, window_params = [{transform_indices = @transform_0, window_bounds = array<i64: 2, 8>}, {pipeline_mode = #tpu.pipeline_mode<synchronous>, transform_indices = @transform_1, window_bounds = array<i64: 136, 64>}, {pipeline_mode = #tpu.pipeline_mode<synchronous>, transform_indices = @transform_2, window_bounds = array<i64: 3, 64>}, {transform_indices = @transform_3, window_bounds = array<i64: 2, 64>}]} {
    %c0 = arith.constant 0 : index
    %c0_0 = arith.constant 0 : index
    %0 = vector.load %arg1[%c0, %c0_0] : memref<2x8xf32, #tpu.memory_space<vmem>>, vector<2x8xf32>
    %1 = arith.truncf %0 : vector<2x8xf32> to vector<2x8xbf16>
    %c0_1 = arith.constant 0 : index
    %c0_2 = arith.constant 0 : index
    %2 = vector.load %arg2[%c0_1, %c0_2] : memref<136x64xbf16, #tpu.memory_space<vmem>>, vector<8x64xbf16>
    %c8 = arith.constant 8 : index
    %c0_3 = arith.constant 0 : index
    %3 = vector.load %arg2[%c8, %c0_3] : memref<136x64xbf16, #tpu.memory_space<vmem>>, vector<64x64xbf16>
    %c72 = arith.constant 72 : index
    %c0_4 = arith.constant 0 : index
    %4 = vector.load %arg2[%c72, %c0_4] : memref<136x64xbf16, #tpu.memory_space<vmem>>, vector<64x64xbf16>
    %cst = arith.constant dense<0.000000e+00> : vector<2x64xf32>
    %5 = tpu.matmul %1, %2, %cst {dimension_numbers = #tpu.dot_dimension_numbers<[1], [0], [0], [1], [0, 0, 1, 1], [], []>} : vector<2x8xbf16>, vector<8x64xbf16>, vector<2x64xf32> -> vector<2x64xf32>
    %c0_5 = arith.constant 0 : index
    %c0_6 = arith.constant 0 : index
    %6 = vector.load %arg3[%c0_5, %c0_6] : memref<3x64xf32, #tpu.memory_space<vmem>>, vector<1x64xf32>
    %7 = vector.shape_cast %6 : vector<1x64xf32> to vector<64xf32>
    %8 = vector.shape_cast %7 : vector<64xf32> to vector<1x64xf32>
    %9 = vector.broadcast %8 : vector<1x64xf32> to vector<2x64xf32>
    %10 = arith.addf %5, %9 : vector<2x64xf32>
    %11 = math.tanh %10 : vector<2x64xf32>
    %12 = arith.truncf %11 : vector<2x64xf32> to vector<2x64xbf16>
    %cst_7 = arith.constant dense<0.000000e+00> : vector<2x64xf32>
    %13 = tpu.matmul %12, %3, %cst_7 {dimension_numbers = #tpu.dot_dimension_numbers<[1], [0], [0], [1], [0, 0, 1, 1], [], []>} : vector<2x64xbf16>, vector<64x64xbf16>, vector<2x64xf32> -> vector<2x64xf32>
    %c1 = arith.constant 1 : index
    %c0_8 = arith.constant 0 : index
    %14 = vector.load %arg3[%c1, %c0_8] : memref<3x64xf32, #tpu.memory_space<vmem>>, vector<1x64xf32>
    %15 = vector.shape_cast %14 : vector<1x64xf32> to vector<64xf32>
    %16 = vector.shape_cast %15 : vector<64xf32> to vector<1x64xf32>
    %17 = vector.broadcast %16 : vector<1x64xf32> to vector<2x64xf32>
    %18 = arith.addf %13, %17 : vector<2x64xf32>
    %19 = math.tanh %18 : vector<2x64xf32>
    %20 = arith.truncf %19 : vector<2x64xf32> to vector<2x64xbf16>
    %cst_9 = arith.constant dense<0.000000e+00> : vector<2x64xf32>
    %21 = tpu.matmul %20, %4, %cst_9 {dimension_numbers = #tpu.dot_dimension_numbers<[1], [0], [0], [1], [0, 0, 1, 1], [], []>} : vector<2x64xbf16>, vector<64x64xbf16>, vector<2x64xf32> -> vector<2x64xf32>
    %c2 = arith.constant 2 : index
    %c0_10 = arith.constant 0 : index
    %22 = vector.load %arg3[%c2, %c0_10] : memref<3x64xf32, #tpu.memory_space<vmem>>, vector<1x64xf32>
    %23 = vector.shape_cast %22 : vector<1x64xf32> to vector<64xf32>
    %24 = vector.shape_cast %23 : vector<64xf32> to vector<1x64xf32>
    %25 = vector.broadcast %24 : vector<1x64xf32> to vector<2x64xf32>
    %26 = arith.addf %21, %25 : vector<2x64xf32>
    %c0_11 = arith.constant 0 : index
    %c0_12 = arith.constant 0 : index
    %27 = vector.load %arg4[%c0_11, %c0_12] : memref<2x64xf32, #tpu.memory_space<vmem>>, vector<2x64xf32>
    tpu.vector_store %arg4[%c0_11, %c0_12], %26 {strides = array<i32>} : memref<2x64xf32, #tpu.memory_space<vmem>>, vector<2x64xf32>,
    return
  }
  func.func @transform_0(%arg0: i32) -> (i32, i32) {
    %c0_i32 = arith.constant 0 : i32
    %c0_i32_0 = arith.constant 0 : i32
    return %arg0, %c0_i32 : i32, i32
  }
  func.func @transform_1(%arg0: i32) -> (i32, i32) {
    %c0_i32 = arith.constant 0 : i32
    %c0_i32_0 = arith.constant 0 : i32
    %c0_i32_1 = arith.constant 0 : i32
    return %c0_i32, %c0_i32_0 : i32, i32
  }
  func.func @transform_2(%arg0: i32) -> (i32, i32) {
    %c0_i32 = arith.constant 0 : i32
    %c0_i32_0 = arith.constant 0 : i32
    %c0_i32_1 = arith.constant 0 : i32
    return %c0_i32, %c0_i32_0 : i32, i32
  }
  func.func @transform_3(%arg0: i32) -> (i32, i32) {
    %c0_i32 = arith.constant 0 : i32
    %c0_i32_0 = arith.constant 0 : i32
    return %arg0, %c0_i32 : i32, i32
  }
}

</mosaic_0001>

<llo_original>
// kernel: _actor_mean_packed.1
$region0: #{_actor_mean_packed.1}
  #allocation0 [shape = 'u32[]', space=smem, size = 0x4, offset = 0x4, fixed_abs, tag = 'smem constant byte address 0x4 - core index']
  #allocation1 [shape = 'u32[144,128]{1,0:T(1,128)}', space=vmem, size = 0x12000, scoped, tag = 'internal scratch']
  %s0 = inlined_call_operand.vmem [shape: f32[2,8], index: 0, kind: input, shape index: {}]
  %s1 = inlined_call_operand.vmem [shape: bf16[136,64], index: 1, kind: input, shape index: {}]
  %s2 = inlined_call_operand.vmem [shape: f32[3,64], index: 2, kind: input, shape index: {}]
  %s3 = inlined_call_operand.hbm [shape: f32[2,64], index: 3, kind: output, shape index: {}]
  %s4 = sld [smem:[#allocation0]]
  $region22: #{_actor_mean_packed.1} parent=0
    _
  %s6 = ssub.s32 1, %s4
  %s7 = scalar_select 0, %s6, %s4
  $region1: #{_actor_mean_packed.1} parent=0
    #allocation2 [shape = 'u8[1024]{0}', space=vmem, size = 0x400, scoped, tag = 'output window, operand 0, single buffered']
    #allocation3 [shape = 's32[1]{0}', space=sflag, size = 0x4, scoped, tag = 'scoped memory for _actor_mean_packed.1']
    %8 = vsyncpa [#allocation3], 0
    // Predicated region
    $region2: #{_actor_mean_packed.1} parent=1 // pred_check
      _
    $region3: #{_actor_mean_packed.1} parent=1 // pred_check_branch
      %10 = sbr.rel (0) target = $region5
    $region4: #{_actor_mean_packed.1} parent=1 // pred_region
      _
    $region5: #{_actor_mean_packed.1} parent=1 // pred_fallthru
      _
    // Predicated region
    $region6: #{_actor_mean_packed.1} parent=1 // pred_check
      _
    $region7: #{_actor_mean_packed.1} parent=1 // pred_check_branch
      %12 = sbr.rel (0) target = $region9
    $region8: #{_actor_mean_packed.1} parent=1 // pred_region
      _
    $region9: #{_actor_mean_packed.1} parent=1 // pred_fallthru
      _
    // Predicated region
    $region10: #{_actor_mean_packed.1} parent=1 // pred_check
      _
    $region11: #{_actor_mean_packed.1} parent=1 // pred_check_branch
      %14 = sbr.rel (0) target = $region13
    $region12: #{_actor_mean_packed.1} parent=1 // pred_region
      _
    $region13: #{_actor_mean_packed.1} parent=1 // pred_fallthru
      _
    %v16 = vld [vmem:[%s0] sm:$0x3]
    %v17 = vpack.c.bf16 %v16, %v16
    %v18 = vld [vmem:[%s1] sm:$0xf]
    %v19 = vld [vmem:[%s1 + $0x4] sm:$0xf]
    %v20 = vld [vmem:[%s1 + $0x8] sm:$0xf]
    %v21 = vld [vmem:[%s1 + $0xc] sm:$0xf]
    %v22 = vld [vmem:[%s1 + $0x10] sm:$0xf]
    %v23 = vld [vmem:[%s1 + $0x14] sm:$0xf]
    %v24 = vld [vmem:[%s1 + $0x18] sm:$0xf]
    %v25 = vld [vmem:[%s1 + $0x1c] sm:$0xf]
    %v26 = vld [vmem:[%s1 + $0x20] sm:$0xf]
    %v27 = vld [vmem:[%s1 + $0x24] sm:$0xf]
    %v28 = vld [vmem:[%s1 + $0x28] sm:$0xf]
    %v29 = vld [vmem:[%s1 + $0x2c] sm:$0xf]
    %v30 = vld [vmem:[%s1 + $0x30] sm:$0xf]
    %v31 = vld [vmem:[%s1 + $0x34] sm:$0xf]
    %v32 = vld [vmem:[%s1 + $0x38] sm:$0xf]
    %v33 = vld [vmem:[%s1 + $0x3c] sm:$0xf]
    %v34 = vld [vmem:[%s1 + $0x40] sm:$0xf]
    %v35 = vld [vmem:[%s2] sm:$0x1]
    %v36 = vlaneseq
    %v37 = vshrl.u32 %v36, 7
    %v38 = vsub.s32 0, %v37
    %v39 = vrot.slane %v35, %v38
    %vm40 = vcmask 64512
    %v42 = vsel %vm40, %v17, 0
    %vm44 = vcmask 1043456
    %v46 = vsel %vm44, %v18, 0
    %48 = vmatprep.subr.bf16.mxu0 0
    %49 = vmatpush1.bf16.msra.mxu0 0
    %50 = vmatprep.subr.bf16.mxu0 0
    %51 = vmatpush1.bf16.msra.mxu0 0
    %52 = vmatprep.subr.bf16.mxu0 0
    %53 = vmatpush1.bf16.msra.mxu0 0
    %54 = vmatprep.subr.bf16.mxu0 0
    %55 = vmatpush1.bf16.msra.mxu0 0
    %56 = vmatprep.subr.bf16.mxu0 0
    %57 = vmatpush1.bf16.msra.mxu0 0
    %58 = vmatprep.subr.bf16.mxu0 0
    %59 = vmatpush1.bf16.msra.mxu0 0
    %60 = vmatprep.subr.bf16.mxu0 0
    %61 = vmatpush1.bf16.msra.mxu0 0
    %62 = vmatprep.subr.bf16.mxu0 0
    %63 = vmatpush1.bf16.msra.mxu0 %v46
    %64 = vmatprep.subr.bf16.mxu0 0
    %65 = vmatpush2.bf16.msra.mxu0 0
    %66 = vmatprep.subr.bf16.mxu0 0
    %67 = vmatpush2.bf16.msra.mxu0 0
    %68 = vmatprep.subr.bf16.mxu0 0
    %69 = vmatpush2.bf16.msra.mxu0 0
    %70 = vmatprep.subr.bf16.mxu0 0
    %71 = vmatpush2.bf16.msra.mxu0 0
    %72 = vmatprep.subr.bf16.mxu0 0
    %73 = vmatpush2.bf16.msra.mxu0 0
    %74 = vmatprep.subr.bf16.mxu0 0
    %75 = vmatpush2.bf16.msra.mxu0 0
    %76 = vmatprep.subr.bf16.mxu0 0
    %77 = vmatpush2.bf16.msra.mxu0 0
    %78 = vmatprep.subr.bf16.mxu0 0
    %79 = vmatpush2.bf16.msra.mxu0 0
    %80 = vmatprep.mubr.bf16.mxu0 0
    %81 = vmatmul.mubr.bf16.gmra.mxu0 %v42
    %v82 = vpop.f32.mrf.mxu0
    %v83 = vadd.f32 %v39, %v82
    %v84 = vpop.f32.mrf.mxu0
    %v85 = vpop.f32.mrf.mxu0
    %v86 = vpop.f32.mrf.mxu0
    %87 = vdwg.mxu0
    %v88 = vtanh.pop %v83
    %v89 = vpack.c.bf16 %v88, %v88
    %v90 = vld [vmem:[%s2 + $0x1] sm:$0x1]
    %v91 = vlaneseq
    %v92 = vshrl.u32 %v91, 7
    %v93 = vsub.s32 0, %v92
    %v94 = vrot.slane %v90, %v93
    %v103 = vunpack.c.l.b16 %v19
    %v104 = vunpack.c.l.b16 %v20
    %v105 = vunpack.c.l.b16 %v21
    %v106 = vunpack.c.l.b16 %v22
    %v107 = vunpack.c.l.b16 %v23
    %v108 = vunpack.c.l.b16 %v24
    %v109 = vunpack.c.l.b16 %v25
    %v110 = vunpack.c.l.b16 %v26
    %v111 = vpack.c.b16 %v104, %v103
    %v112 = vpack.c.b16 %v106, %v105
    %v113 = vpack.c.b16 %v108, %v107
    %v114 = vpack.c.b16 %v110, %v109
    %vm119 = vcmask 523264
    %v121 = vsel %vm119, %v89, 0
    %123 = vmatprep.subr.bf16.mxu0 0
    %124 = vmatpush1.bf16.msra.mxu0 0
    %125 = vmatprep.subr.bf16.mxu0 0
    %126 = vmatpush1.bf16.msra.mxu0 0
    %127 = vmatprep.subr.bf16.mxu0 0
    %128 = vmatpush1.bf16.msra.mxu0 0
    %129 = vmatprep.subr.bf16.mxu0 0
    %130 = vmatpush1.bf16.msra.mxu0 0
    %131 = vmatprep.subr.bf16.mxu0 0
    %132 = vmatpush1.bf16.msra.mxu0 %v114
    %133 = vmatprep.subr.bf16.mxu0 0
    %134 = vmatpush1.bf16.msra.mxu0 %v113
    %135 = vmatprep.subr.bf16.mxu0 0
    %136 = vmatpush1.bf16.msra.mxu0 %v112
    %137 = vmatprep.subr.bf16.mxu0 0
    %138 = vmatpush1.bf16.msra.mxu0 %v111
    %139 = vmatprep.subr.bf16.mxu0 0
    %140 = vmatpush2.bf16.msra.mxu0 0
    %141 = vmatprep.subr.bf16.mxu0 0
    %142 = vmatpush2.bf16.msra.mxu0 0
    %143 = vmatprep.subr.bf16.mxu0 0
    %144 = vmatpush2.bf16.msra.mxu0 0
    %145 = vmatprep.subr.bf16.mxu0 0
    %146 = vmatpush2.bf16.msra.mxu0 0
    %147 = vmatprep.subr.bf16.mxu0 0
    %148 = vmatpush2.bf16.msra.mxu0 0
    %149 = vmatprep.subr.bf16.mxu0 0
    %150 = vmatpush2.bf16.msra.mxu0 0
    %151 = vmatprep.subr.bf16.mxu0 0
    %152 = vmatpush2.bf16.msra.mxu0 0
    %153 = vmatprep.subr.bf16.mxu0 0
    %154 = vmatpush2.bf16.msra.mxu0 0
    %155 = vmatprep.mubr.bf16.mxu0 0
    %156 = vmatmul.mubr.bf16.gmra.mxu0 %v121
    %v157 = vpop.f32.mrf.mxu0
    %v158 = vadd.f32 %v94, %v157
    %v159 = vpop.f32.mrf.mxu0
    %v160 = vpop.f32.mrf.mxu0
    %v161 = vpop.f32.mrf.mxu0
    %162 = vdwg.mxu0
    %v163 = vtanh.pop %v158
    %v164 = vpack.c.bf16 %v163, %v163
    %v165 = vld [vmem:[%s2 + $0x2] sm:$0x1]
    %v166 = vlaneseq
    %v167 = vshrl.u32 %v166, 7
    %v168 = vsub.s32 0, %v167
    %v169 = vrot.slane %v165, %v168
    %v178 = vunpack.c.l.b16 %v27
    %v179 = vunpack.c.l.b16 %v28
    %v180 = vunpack.c.l.b16 %v29
    %v181 = vunpack.c.l.b16 %v30
    %v182 = vunpack.c.l.b16 %v31
    %v183 = vunpack.c.l.b16 %v32
    %v184 = vunpack.c.l.b16 %v33
    %v185 = vunpack.c.l.b16 %v34
    %v186 = vpack.c.b16 %v179, %v178
    %v187 = vpack.c.b16 %v181, %v180
    %v188 = vpack.c.b16 %v183, %v182
    %v189 = vpack.c.b16 %v185, %v184
    %v195 = vsel %vm119, %v164, 0
    %197 = vmatprep.subr.bf16.mxu0 0
    %198 = vmatpush1.bf16.msra.mxu0 0
    %199 = vmatprep.subr.bf16.mxu0 0
    %200 = vmatpush1.bf16.msra.mxu0 0
    %201 = vmatprep.subr.bf16.mxu0 0
    %202 = vmatpush1.bf16.msra.mxu0 0
    %203 = vmatprep.subr.bf16.mxu0 0
    %204 = vmatpush1.bf16.msra.mxu0 0
    %205 = vmatprep.subr.bf16.mxu0 0
    %206 = vmatpush1.bf16.msra.mxu0 %v189
    %207 = vmatprep.subr.bf16.mxu0 0
    %208 = vmatpush1.bf16.msra.mxu0 %v188
    %209 = vmatprep.subr.bf16.mxu0 0
    %210 = vmatpush1.bf16.msra.mxu0 %v187
    %211 = vmatprep.subr.bf16.mxu0 0
    %212 = vmatpush1.bf16.msra.mxu0 %v186
    %213 = vmatprep.subr.bf16.mxu0 0
    %214 = vmatpush2.bf16.msra.mxu0 0
    %215 = vmatprep.subr.bf16.mxu0 0
    %216 = vmatpush2.bf16.msra.mxu0 0
    %217 = vmatprep.subr.bf16.mxu0 0
    %218 = vmatpush2.bf16.msra.mxu0 0
    %219 = vmatprep.subr.bf16.mxu0 0
    %220 = vmatpush2.bf16.msra.mxu0 0
    %221 = vmatprep.subr.bf16.mxu0 0
    %222 = vmatpush2.bf16.msra.mxu0 0
    %223 = vmatprep.subr.bf16.mxu0 0
    %224 = vmatpush2.bf16.msra.mxu0 0
    %225 = vmatprep.subr.bf16.mxu0 0
    %226 = vmatpush2.bf16.msra.mxu0 0
    %227 = vmatprep.subr.bf16.mxu0 0
    %228 = vmatpush2.bf16.msra.mxu0 0
    %229 = vmatprep.mubr.bf16.mxu0 0
    %230 = vmatmul.mubr.bf16.gmra.mxu0 %v195
    %v231 = vpop.f32.mrf.mxu0
    %v232 = vadd.f32 %v169, %v231
    %v233 = vpop.f32.mrf.mxu0
    %v234 = vpop.f32.mrf.mxu0
    %v235 = vpop.f32.mrf.mxu0
    %236 = vdwg.mxu0
    %vm237 = vcmask 517120
    %238 = vst.msk [vmem:[#allocation2] sm:$0x3] %vm237, %v232
    // Predicated region
    $region14: #{_actor_mean_packed.1} parent=1 // pred_check
      _
    $region15: #{_actor_mean_packed.1} parent=1 // pred_check_branch
      %240 = sbr.rel (0) target = $region17
    $region16: #{_actor_mean_packed.1} parent=1 // pred_region
      %s242 = ssub.s32 32, 32
      %243 = vsyncadd [#allocation3], %s242
      %s245 = sshll.u32 [#allocation2], 4
      %s246 = int_to_ptr.vmem [resolvable:$true] %s245
      %248 = dma.vmem_to_hbm [thread:$0]  %s246, 32, %s3, [#allocation3]
    $region17: #{_actor_mean_packed.1} parent=1 // pred_fallthru
      _
    // Predicated region
    $region18: #{_actor_mean_packed.1} parent=1 // pred_check
      _
    $region19: #{_actor_mean_packed.1} parent=1 // pred_check_branch
      %250 = sbr.rel (0) target = $region21
    $region20: #{_actor_mean_packed.1} parent=1 // pred_region
      %251 = dma.done [#allocation3], 32
    $region21: #{_actor_mean_packed.1} parent=1 // pred_fallthru
      _
    %252 = vsyncpa [#allocation3], 1

</llo_original>
